<compile_context>
chip_gen: v7x
topology: tpu7x:2x2x1
jax: 0.10.0
libtpu: 0.0.40
codegen_flags: <defaults>
</compile_context>

<pallas_src>
import jax
import jax.numpy as jnp
from jax.experimental import pallas as pl
from jax.experimental.pallas import tpu as pltpu


def _dens_attention_kernel(x_ref, o_ref):
    """out = emb * softmax(size-1 axis) + emb  ==  2 * emb  (exact)."""
    x = x_ref[...]
    o_ref[...] = x + x


def _pick_2d_layout(shape):
    """Lane-dense 2D factorization of the flat tensor.

    Prefers (rows, cols) with cols a multiple of 128 (full-lane vregs, no
    masked vst) and rows a multiple of 8 (sublane rule). Falls back to
    (B*N, D) full-extent blocks when the element count does not factor.
    """
    B, N, D = shape
    total = B * N * D
    for cols in (512, 256, 128, 1024, 2048):
        if total % cols == 0 and (total // cols) % 8 == 0:
            return total // cols, cols
    return B * N, D


def _pick_row_tile(rows, cols, itemsize, *, target_bytes=1 << 20, min_steps=4):
    """Largest multiple-of-8 divisor of `rows` whose tile is <= target_bytes,
    preferring one that still leaves at least `min_steps` grid steps."""
    if rows % 8 != 0:
        return rows                                   # single full-extent block
    max_tm = max(8, target_bytes // (cols * itemsize))
    cand = [d for d in range(8, min(rows, max_tm) + 1, 8) if rows % d == 0]
    if not cand:
        return 8
    pref = [d for d in cand if rows // d >= min_steps]
    return max(pref) if pref else max(cand)


def dens_attention(emb, conv_w=None, conv_b=None, bn_gamma=None, bn_beta=None,
                   bn_rm=None, bn_rv=None, *, bn_eps=1e-5,
                   target_block_bytes=1 << 20):
    """Pallas forward of the PyTorch `dens_attention` module.

    Conv / BatchNorm parameters are accepted for API fidelity but cannot
    affect the result: softmax over the trailing size-1 axis is exactly 1,
    so out == 2 * emb. They are therefore never sent to the device kernel.
    """
    del conv_w, conv_b, bn_gamma, bn_beta, bn_rm, bn_rv, bn_eps  # dead params

    B, N, D = emb.shape
    rows, cols = _pick_2d_layout(emb.shape)
    x2d = emb.reshape(rows, cols)                      # contiguous -> free view

    itemsize = jnp.dtype(emb.dtype).itemsize
    tm = _pick_row_tile(rows, cols, itemsize, target_bytes=target_block_bytes)
    grid = (rows // tm,)

    out2d = pl.pallas_call(
        _dens_attention_kernel,
        out_shape=jax.ShapeDtypeStruct((rows, cols), emb.dtype),
        grid_spec=pltpu.PrefetchScalarGridSpec(
            num_scalar_prefetch=0,
            grid=grid,
            in_specs=[pl.BlockSpec((tm, cols), lambda i: (i, 0))],
            out_specs=pl.BlockSpec((tm, cols), lambda i: (i, 0)),
        ),
        compiler_params=pltpu.CompilerParams(
            dimension_semantics=("parallel",)),
    )(x2d)

    return out2d.reshape(B, N, D)


def dens_attention_ref(emb, conv_w, conv_b, bn_gamma, bn_beta, bn_rm, bn_rv,
                       bn_eps=1e-5):
    """Plain-JAX mirror of the full PyTorch forward (eval-mode BatchNorm)."""
    B, N, D = emb.shape
    w2d = conv_w.reshape(2 * D, D)
    key = jnp.einsum("bnd,cd->bnc", emb, w2d) + conv_b        # Conv1d(k=1)
    key = jnp.maximum(key, 0.0)                               # ReLU
    key = (key - bn_rm) * jax.lax.rsqrt(bn_rv + bn_eps) * bn_gamma + bn_beta
    g = jnp.max(key, axis=-1, keepdims=True)                  # channel max
    s = jax.nn.softmax(g, axis=-1)                            # size-1 axis -> 1.0
    s = jnp.repeat(s, D, axis=-1)                             # repeat_interleave
    return emb * s + emb


if __name__ == "__main__":
    B, N, D = 4, 256, 32          # batch, points, emb_dim
    C = 2 * D

    key = jax.random.PRNGKey(0)
    k_emb, k_w, k_b, k_g, k_bt, k_rm, k_rv = jax.random.split(key, 7)

    emb      = jax.random.normal(k_emb, (B, N, D), dtype=jnp.float32)
    conv_w   = 0.1 * jax.random.normal(k_w, (C, D, 1), dtype=jnp.float32)
    conv_b   = 0.1 * jax.random.normal(k_b, (C,), dtype=jnp.float32)
    bn_gamma = 1.0 + 0.05 * jax.random.normal(k_g, (C,), dtype=jnp.float32)
    bn_beta  = 0.05 * jax.random.normal(k_bt, (C,), dtype=jnp.float32)
    bn_rm    = 0.05 * jax.random.normal(k_rm, (C,), dtype=jnp.float32)
    bn_rv    = 1.0 + jnp.abs(jax.random.normal(k_rv, (C,), dtype=jnp.float32))

    out = jax.jit(dens_attention)(emb, conv_w, conv_b, bn_gamma, bn_beta,
                                  bn_rm, bn_rv)
    out = jax.block_until_ready(out)

    ref = dens_attention_ref(emb, conv_w, conv_b, bn_gamma, bn_beta, bn_rm, bn_rv)
    assert out.shape == (B, N, D)
    assert out.dtype == emb.dtype
    assert jnp.allclose(out, ref, atol=1e-6, rtol=1e-6), "mismatch vs reference"

    print("KERNEL_OK")
</pallas_src>

<mosaic_0001>
module attributes {stable_mosaic.version = 11 : i64} {
  func.func @_dens_attention_kernel(%arg0: i32, %arg1: memref<16x512xf32, #tpu.memory_space<vmem>>, %arg2: memref<16x512xf32, #tpu.memory_space<vmem>>) attributes {dimension_semantics = [#tpu.dimension_semantics<parallel>], iteration_bounds = array<i64: 4>, scalar_prefetch = 0 : i64, scratch_operands = 0 : i64, tpu.core_type = #tpu.core_type<tc>, window_params = [{transform_indices = @transform_0, window_bounds = array<i64: 16, 512>}, {transform_indices = @transform_1, window_bounds = array<i64: 16, 512>}]} {
    %c0 = arith.constant 0 : index
    %c0_0 = arith.constant 0 : index
    %0 = vector.load %arg1[%c0, %c0_0] : memref<16x512xf32, #tpu.memory_space<vmem>>, vector<16x512xf32>
    %1 = arith.addf %0, %0 : vector<16x512xf32>
    %c0_1 = arith.constant 0 : index
    %c0_2 = arith.constant 0 : index
    %2 = vector.load %arg2[%c0_1, %c0_2] : memref<16x512xf32, #tpu.memory_space<vmem>>, vector<16x512xf32>
    tpu.vector_store %arg2[%c0_1, %c0_2], %1 {strides = array<i32>} : memref<16x512xf32, #tpu.memory_space<vmem>>, vector<16x512xf32>,
    return
  }
  func.func @transform_0(%arg0: i32) -> (i32, i32) {
    %c0_i32 = arith.constant 0 : i32
    %c0_i32_0 = arith.constant 0 : i32
    return %arg0, %c0_i32 : i32, i32
  }
  func.func @transform_1(%arg0: i32) -> (i32, i32) {
    %c0_i32 = arith.constant 0 : i32
    %c0_i32_0 = arith.constant 0 : i32
    return %arg0, %c0_i32 : i32, i32
  }
}

</mosaic_0001>

<llo_original>
// kernel: dens_attention.1
$region0: #{dens_attention.1}
  #allocation0 [shape = 'u32[]', space=smem, size = 0x4, offset = 0x4, fixed_abs, tag = 'smem constant byte address 0x4 - core index']
  #allocation1 [shape = 'u32[144,128]{1,0:T(1,128)}', space=vmem, size = 0x12000, scoped, tag = 'internal scratch']
  %s0 = inlined_call_operand.vmem [shape: f32[64,512], index: 0, kind: input, shape index: {}]
  %s1 = inlined_call_operand.vmem [shape: f32[64,512], index: 1, kind: output, shape index: {}]
  %s2 = sld [smem:[#allocation0]]
  $region37: #{dens_attention.1} parent=0
    _
  %s4 = ssub.s32 1, %s2
  %s5 = scalar_select 0, %s4, %s2
  loop: start=0, step=1, limit=6
  $region2: #{dens_attention.1} parent=0 // loop_pre_header
    _
  $region3: #{dens_attention.1} parent=0 // loop_header
    %s7 = sphi 0, %s11
    %p8 = scmp.ge.s32.totalorder %s7, 6
    %s17 = sphi 0, %s19
    %s20 = sphi 0, %s17
    %s21 = sphi 0, %s20
    %s37 = sphi 0, %s21
    %s43 = sphi 0, %s45
    %s46 = sphi 0, %s43
    %s47 = sphi 0, %s46
    %s63 = sphi 0, %s47
  $region4: #{dens_attention.1} parent=0 // loop_header_branch
    %10 = sbr.rel (%p8) target = $region8
  $region5: #{dens_attention.1} parent=0 // loop_body
    %s12 = ssub.s32 %s7, 1
    %s13 = ssub.s32 %s7, 2
    %s14 = sadd.s32 %s7, 1
    %s15 = ssub.s32 %s7, %s14
    %p16 = scmp.eq.s32.totalorder %s15, 0
    %s18 = sadd.s32 %s17, 1
    %s19 = scalar_select %p16, %s17, %s18
    %p22 = pneg %p16
    %p23 = scmp.eq.s32.totalorder %s7, 3
    %p24 = por %p22, %p23
    %p25 = scmp.ne.s32.totalorder %s17, %s20
    %p26 = scmp.eq.s32.totalorder %s7, 0
    %p27 = por %p25, %p26
    %p28 = scmp.ne.s32.totalorder %s17, %s20
    %p29 = scmp.eq.s32.totalorder %s12, 3
    %p30 = por %p28, %p29
    %p31 = scmp.ne.s32.totalorder %s20, %s21
    %p32 = scmp.eq.s32.totalorder %s12, 0
    %p33 = por %p31, %p32
    %p34 = scmp.ne.s32.totalorder %s20, %s21
    %p35 = scmp.eq.s32.totalorder %s13, 3
    %p36 = por %p34, %p35
    %p38 = scmp.ne.s32.totalorder %s21, %s37
    %p39 = scmp.eq.s32.totalorder %s13, 0
    %p40 = por %p38, %p39
    %s41 = ssub.s32 %s7, %s14
    %p42 = scmp.eq.s32.totalorder %s41, 0
    %s44 = sadd.s32 %s43, 1
    %s45 = scalar_select %p42, %s43, %s44
    %p48 = pneg %p42
    %p49 = scmp.eq.s32.totalorder %s7, 3
    %p50 = por %p48, %p49
    %p51 = scmp.ne.s32.totalorder %s43, %s46
    %p52 = scmp.eq.s32.totalorder %s7, 0
    %p53 = por %p51, %p52
    %p54 = scmp.ne.s32.totalorder %s43, %s46
    %p55 = scmp.eq.s32.totalorder %s12, 3
    %p56 = por %p54, %p55
    %p57 = scmp.ne.s32.totalorder %s46, %s47
    %p58 = scmp.eq.s32.totalorder %s12, 0
    %p59 = por %p57, %p58
    %p60 = scmp.ne.s32.totalorder %s46, %s47
    %p61 = scmp.eq.s32.totalorder %s13, 3
    %p62 = por %p60, %p61
    %p64 = scmp.ne.s32.totalorder %s47, %s63
    %p65 = scmp.eq.s32.totalorder %s13, 0
    %p66 = por %p64, %p65
    %p67 = scmp.le.s32.totalorder 1, %s7
    %p68 = scmp.lt.s32.totalorder %s7, 5
    %p69 = pnand %p67, %p68
    %p70 = pneg %p69
    // Predicated region
    $region9: #{dens_attention.1} parent=5 // pred_check
      _
    $region10: #{dens_attention.1} parent=5 // pred_check_branch
      %72 = sbr.rel (%p69) target = $region12
    $region11: #{dens_attention.1} parent=5 // pred_region
      %s73 = ssub.s32 %s7, 1
    $region12: #{dens_attention.1} parent=5 // pred_fallthru
      _
    %p74 = scmp.lt.s32.totalorder %s7, 4
    // Predicated region
    $region13: #{dens_attention.1} parent=5 // pred_check
      %p75 = pneg %p74
    $region14: #{dens_attention.1} parent=5 // pred_check_branch
      %77 = sbr.rel (%p75) target = $region16
    $region15: #{dens_attention.1} parent=5 // pred_region
      // Predicated region
      $region17: #{dens_attention.1} parent=15 // pred_check
        %p78 = pneg %p27
      $region18: #{dens_attention.1} parent=15 // pred_check_branch
        %80 = sbr.rel (%p78) target = $region20
      $region19: #{dens_attention.1} parent=15 // pred_region
        %s81 = smul.u32 2, %s7
        %p82 = scmp.lt.s32.totalorder %s81, 7
        %s83 = scalar_select %p82, %s81, 7
        %s84 = smul.addr %s83, 4
        %s85 = smul.addr %s84, 8
        %s86 = scalar_lea.vmem %s0, %s85
        %s87 = smul.u32 2, %s7
      $region20: #{dens_attention.1} parent=15 // pred_fallthru
        _
    $region16: #{dens_attention.1} parent=5 // pred_fallthru
      _
    %p88 = scmp.le.s32.totalorder 1, %s7
    %p89 = scmp.lt.s32.totalorder %s7, 5
    %p90 = pnand %p88, %p89
    %p91 = pneg %p90
    // Predicated region
    $region21: #{dens_attention.1} parent=5 // pred_check
      _
    $region22: #{dens_attention.1} parent=5 // pred_check_branch
      %93 = sbr.rel (%p90) target = $region24
    $region23: #{dens_attention.1} parent=5 // pred_region
      %s94 = ssub.s32 %s7, 1
      %s95 = smul.u32 2, %s12
      %p96 = scmp.lt.s32.totalorder %s95, 7
      %s97 = scalar_select %p96, %s95, 7
      %s98 = smul.addr %s97, 4
      %s99 = smul.addr %s98, 8
      %s100 = scalar_lea.vmem %s0, %s99
      %p101 = pneg %p33
      %p102 = pneg %p30
      %p103 = pneg %p59
      %p104 = pneg %p56
      %s105 = smul.u32 2, %s12
      %p106 = scmp.lt.s32.totalorder %s105, 7
      %s107 = scalar_select %p106, %s105, 7
      %s108 = smul.addr %s107, 4
      %s109 = smul.addr %s108, 8
      %s110 = scalar_lea.vmem %s1, %s109
      %s111 = smul.u32 2, %s12
      %p112 = scmp.lt.s32.totalorder %s111, 7
      %s113 = scalar_select %p112, %s111, 7
      %s114 = smul.addr %s113, 4
      %s115 = smul.addr %s114, 8
      %s116 = scalar_lea.vmem %s0, %s115
      %s117 = smul.u32 2, %s12
      %s118 = smul.u32 2, %s12
      %p119 = scmp.lt.s32.totalorder %s118, 7
      %s120 = scalar_select %p119, %s118, 7
      %s121 = smul.addr %s120, 4
      %s122 = smul.addr %s121, 8
      %s123 = scalar_lea.vmem %s1, %s122
      %s124 = smul.u32 2, %s12
      %v125 = vld [vmem:[%s116] sm:$0xff]
      %v126 = vld [vmem:[%s116 + $0x8] sm:$0xff]
      %v127 = vld [vmem:[%s116 + $0x10] sm:$0xff]
      %v128 = vld [vmem:[%s116 + $0x18] sm:$0xff]
      %v129 = vld [vmem:[%s116 + $0x20] sm:$0xff]
      %v130 = vld [vmem:[%s116 + $0x28] sm:$0xff]
      %v131 = vld [vmem:[%s116 + $0x30] sm:$0xff]
      %v132 = vld [vmem:[%s116 + $0x38] sm:$0xff]
      %v133 = vadd.f32 %v125, %v125
      %v134 = vadd.f32 %v126, %v126
      %v135 = vadd.f32 %v127, %v127
      %v136 = vadd.f32 %v128, %v128
      %v137 = vadd.f32 %v129, %v129
      %v138 = vadd.f32 %v130, %v130
      %v139 = vadd.f32 %v131, %v131
      %v140 = vadd.f32 %v132, %v132
      %141 = vst [vmem:[%s123] sm:$0xff] %v133
      %142 = vst [vmem:[%s123 + $0x8] sm:$0xff] %v134
      %143 = vst [vmem:[%s123 + $0x10] sm:$0xff] %v135
      %144 = vst [vmem:[%s123 + $0x18] sm:$0xff] %v136
      %145 = vst [vmem:[%s123 + $0x20] sm:$0xff] %v137
      %146 = vst [vmem:[%s123 + $0x28] sm:$0xff] %v138
      %147 = vst [vmem:[%s123 + $0x30] sm:$0xff] %v139
      %148 = vst [vmem:[%s123 + $0x38] sm:$0xff] %v140
      %s149 = smul.u32 2, %s12
      %p150 = scmp.lt.s32.totalorder %s149, 7
      %s151 = scalar_select %p150, %s149, 7
      %s152 = smul.addr %s151, 4
      %s153 = smul.addr %s152, 8
      %s154 = scalar_lea.vmem %s1, %s153
      // Predicated region
      $region25: #{dens_attention.1} parent=23 // pred_check
        %p155 = pneg %p56
      $region26: #{dens_attention.1} parent=23 // pred_check_branch
        %157 = sbr.rel (%p155) target = $region28
      $region27: #{dens_attention.1} parent=23 // pred_region
        %s158 = smul.u32 2, %s12
      $region28: #{dens_attention.1} parent=23 // pred_fallthru
        _
    $region24: #{dens_attention.1} parent=5 // pred_fallthru
      _
    %p159 = scmp.le.s32.totalorder 2, %s7
    // Predicated region
    $region29: #{dens_attention.1} parent=5 // pred_check
      %p160 = pneg %p159
    $region30: #{dens_attention.1} parent=5 // pred_check_branch
      %162 = sbr.rel (%p160) target = $region32
    $region31: #{dens_attention.1} parent=5 // pred_region
      %s163 = ssub.s32 %s7, 2
      // Predicated region
      $region33: #{dens_attention.1} parent=31 // pred_check
        %p164 = pneg %p62
      $region34: #{dens_attention.1} parent=31 // pred_check_branch
        %166 = sbr.rel (%p164) target = $region36
      $region35: #{dens_attention.1} parent=31 // pred_region
        %s167 = smul.u32 2, %s13
        %p168 = scmp.lt.s32.totalorder %s167, 7
        %s169 = scalar_select %p168, %s167, 7
        %s170 = smul.addr %s169, 4
        %s171 = smul.addr %s170, 8
        %s172 = scalar_lea.vmem %s1, %s171
      $region36: #{dens_attention.1} parent=31 // pred_fallthru
        _
    $region32: #{dens_attention.1} parent=5 // pred_fallthru
      _
  $region6: #{dens_attention.1} parent=0 // loop_footer
    %s11 = sadd.s32 1, %s7
  $region7: #{dens_attention.1} parent=0 // loop_footer_branch
    %6 = sbr.rel target = $region3
  $region8: #{dens_attention.1} parent=0 // loop_exit
    _

</llo_original>
